<compile_context>
chip_gen: v7x
topology: tpu7x:2x2x1
jax: 0.10.0
libtpu: 0.0.40
codegen_flags: <defaults>
</compile_context>

<pallas_src>
import functools

import jax
import jax.numpy as jnp
import numpy as np
from jax.experimental import pallas as pl
from jax.experimental.pallas import tpu as pltpu


def _round_up(x, m):
    return ((x + m - 1) // m) * m


def _pick_tile(dim, want, quantum):
    """Largest multiple of `quantum` <= `want` that divides `dim` (searched down to
    ~want/4); otherwise fall back to padding `dim` (extra HBM pass, rare shapes only)."""
    hi = max(quantum, (min(want, _round_up(dim, quantum)) // quantum) * quantum)
    lo = max(quantum, ((hi // 4) // quantum) * quantum)
    t = hi
    while t >= lo:
        if dim % t == 0:
            return t, dim
        t -= quantum
    return hi, _round_up(dim, hi)


def _pick_row_tile(h, want):
    t = max(1, min(want, h))
    while t > 1 and h % t != 0:
        t -= 1
    return t


# ---------------------------------------------------------------------------
# Kernel 1: conv1 (1x1) + bn1 + relu  ->  y = relu(x @ w_folded + bias)
# Fast path: single K block, no scratch.  Fallback: K-blocked reduction with
# an f32 VMEM accumulator ("arbitrary" inner axis).
# ---------------------------------------------------------------------------
def _conv1x1_bn_relu_kernel(x_ref, w_ref, b_ref, o_ref):
    acc = jnp.dot(x_ref[...], w_ref[...], preferred_element_type=jnp.float32)
    o_ref[...] = jnp.maximum(acc + b_ref[...], 0.0).astype(o_ref.dtype)


def _conv1x1_bn_relu_kernel_kblocked(x_ref, w_ref, b_ref, o_ref, acc_ref):
    k = pl.program_id(1)

    @pl.when(k == 0)
    def _init():
        acc_ref[...] = jnp.zeros_like(acc_ref)

    acc_ref[...] += jnp.dot(x_ref[...], w_ref[...], preferred_element_type=jnp.float32)

    @pl.when(k == pl.num_programs(1) - 1)
    def _finalize():
        o_ref[...] = jnp.maximum(acc_ref[...] + b_ref[...], 0.0).astype(o_ref.dtype)


def matmul_bias_relu(x2d, w, bias, *, out_dtype, tm=1024, tk=512):
    """relu(x2d @ w + bias).  x2d: (M, K) already in compute dtype; w: (K, Nc) with BN
    scale folded and Nc lane-padded; bias: (Nc,)."""
    M, K = x2d.shape
    Nc = w.shape[1]
    cdt = x2d.dtype

    tm_eff, M_pad = _pick_tile(M, tm, 8)
    if K <= tk:                          # single K block (block dim == full dim)
        tk_eff, K_pad = K, K
    else:
        tk_eff, K_pad = _pick_tile(K, tk, 128)

    xc, wc = x2d, w.astype(cdt)
    if M_pad != M or K_pad != K:         # rare fallback; typical shapes tile exactly
        xc = jnp.pad(xc, ((0, M_pad - M), (0, K_pad - K)))
    if K_pad != K:
        wc = jnp.pad(wc, ((0, K_pad - K), (0, 0)))
    b2d = bias.reshape(1, Nc).astype(jnp.float32)

    isz = jnp.dtype(cdt).itemsize
    cost = pl.CostEstimate(
        flops=2 * M_pad * K_pad * Nc, transcendentals=0,
        bytes_accessed=(M_pad * K_pad + K_pad * Nc) * isz
        + M_pad * Nc * jnp.dtype(out_dtype).itemsize)

    nk = K_pad // tk_eff
    if nk == 1:
        out = pl.pallas_call(
            _conv1x1_bn_relu_kernel,
            out_shape=jax.ShapeDtypeStruct((M_pad, Nc), out_dtype),
            grid_spec=pltpu.PrefetchScalarGridSpec(
                num_scalar_prefetch=0,
                grid=(M_pad // tm_eff,),
                in_specs=[
                    pl.BlockSpec((tm_eff, K_pad), lambda i: (i, 0)),
                    pl.BlockSpec((K_pad, Nc), lambda i: (0, 0)),
                    pl.BlockSpec((1, Nc), lambda i: (0, 0)),
                ],
                out_specs=pl.BlockSpec((tm_eff, Nc), lambda i: (i, 0)),
            ),
            compiler_params=pltpu.CompilerParams(dimension_semantics=("parallel",)),
            cost_estimate=cost,
        )(xc, wc, b2d)
    else:
        out = pl.pallas_call(
            _conv1x1_bn_relu_kernel_kblocked,
            out_shape=jax.ShapeDtypeStruct((M_pad, Nc), out_dtype),
            grid_spec=pltpu.PrefetchScalarGridSpec(
                num_scalar_prefetch=0,
                grid=(M_pad // tm_eff, nk),
                in_specs=[
                    pl.BlockSpec((tm_eff, tk_eff), lambda i, k: (i, k)),
                    pl.BlockSpec((tk_eff, Nc), lambda i, k: (k, 0)),
                    pl.BlockSpec((1, Nc), lambda i, k: (0, 0)),
                ],
                out_specs=pl.BlockSpec((tm_eff, Nc), lambda i, k: (i, 0)),
                scratch_shapes=[pltpu.VMEM((tm_eff, Nc), jnp.float32)],
            ),
            compiler_params=pltpu.CompilerParams(
                dimension_semantics=("parallel", "arbitrary")),
            cost_estimate=cost,
        )(xc, wc, b2d)
    return out[:M] if M_pad != M else out


# ---------------------------------------------------------------------------
# Kernel 2: fused conv2 (3x3, stride=1, dilation=d) + bn2 + relu
#                 + conv3 (1x1) + bn3 + residual add + relu, row-tiled.
#
# The padded h1 slab for image n (flattened rows of width Wp, Wp % 8 == 0) is
# DMA'd once per image (index map constant in r); per (n, r) step the kernel
# computes th output rows.  conv2 = 3 MXU matmuls (one per ky) against the
# kx-packed weight (Pp, 3Pp); the 3 kx slabs are combined with static sublane
# shifts of kx*d rows.  conv3 / bias / residual / relu run on the valid
# (th, W, C4) block only, written straight to the unpadded NHWC output.
# ---------------------------------------------------------------------------
def _fused_conv23_kernel(h1_ref, w2p_ref, b2_ref, w3_ref, b3_ref, res_ref, o_ref, *,
                         th, w_valid, wp_a, dil, lin_pad):
    pp = w2p_ref.shape[1]
    c4 = w3_ref.shape[1]
    lout = th * wp_a                    # flat (width-padded) output rows of this block
    lin = lout + lin_pad                # extra rows to cover the kx*dil shifts (8-aligned)

    base = pl.multiple_of(pl.program_id(1) * lout, 8)

    acc = None
    for ky in range(3):                                        # statically unrolled
        off = pl.multiple_of(base + ky * dil * wp_a, 8)        # 8-aligned sublane start
        win = h1_ref[0, pl.ds(off, lin), :]                    # (lin, pp)
        rk = jnp.dot(win, w2p_ref[ky],
                     preferred_element_type=jnp.float32)       # (lin, 3*pp) kx-packed
        part = rk[0:lout, 0:pp]                                # kx = 0
        part = part + rk[dil:dil + lout, pp:2 * pp]            # kx = 1
        part = part + rk[2 * dil:2 * dil + lout, 2 * pp:3 * pp]  # kx = 2
        acc = part if acc is None else acc + part              # no zero-init / scratch

    h2 = jnp.maximum(acc + b2_ref[...], 0.0)                   # bn2 + relu (f32)
    out = jnp.dot(h2.astype(w3_ref.dtype), w3_ref[...],
                  preferred_element_type=jnp.float32)          # conv3 (1x1), (lout, c4)
    out = out.reshape(th, wp_a, c4)[:, :w_valid, :]            # drop width-pad junk cols
    out = out + b3_ref[...] + res_ref[0].astype(jnp.float32)   # bn3 + residual (f32)
    o_ref[0] = jnp.maximum(out, 0.0).astype(o_ref.dtype)


def fused_conv2_conv3(h1_flat, w2p, b2, w3, b3, res_nhwc, *, H, W, wp_a, dil,
                      compute_dtype, th_max=8):
    N, Lp, Pp = h1_flat.shape
    C4 = w3.shape[1]
    th = _pick_row_tile(H, th_max)
    lin_pad = _round_up(2 * dil, 8)
    assert lin_pad <= wp_a and Lp == (H + 2 * dil + 1) * wp_a

    kernel = functools.partial(_fused_conv23_kernel, th=th, w_valid=W, wp_a=wp_a,
                               dil=dil, lin_pad=lin_pad)
    isz = jnp.dtype(compute_dtype).itemsize
    cost = pl.CostEstimate(
        flops=N * H * wp_a * (2 * Pp * 3 * Pp * 3 + 2 * Pp * C4),
        transcendentals=0,
        bytes_accessed=(N * Lp * Pp + 9 * Pp * Pp + Pp * C4 + 2 * N * H * W * C4) * isz)

    return pl.pallas_call(
        kernel,
        out_shape=jax.ShapeDtypeStruct((N, H, W, C4), compute_dtype),
        grid_spec=pltpu.PrefetchScalarGridSpec(
            num_scalar_prefetch=0,
            grid=(N, H // th),
            in_specs=[
                # whole padded h1 image; index constant in r -> DMA'd once per image
                pl.BlockSpec((1, Lp, Pp), lambda n, r: (n, 0, 0)),
                pl.BlockSpec((3, Pp, 3 * Pp), lambda n, r: (0, 0, 0)),
                pl.BlockSpec((1, Pp), lambda n, r: (0, 0)),
                pl.BlockSpec((Pp, C4), lambda n, r: (0, 0)),
                pl.BlockSpec((1, C4), lambda n, r: (0, 0)),
                # residual: UNPADDED row block read straight from the compute-dtype input
                pl.BlockSpec((1, th, W, C4), lambda n, r: (n, r, 0, 0)),
            ],
            out_specs=pl.BlockSpec((1, th, W, C4), lambda n, r: (n, r, 0, 0)),
        ),
        compiler_params=pltpu.CompilerParams(
            dimension_semantics=("parallel", "parallel"),
            vmem_limit_bytes=40 * 1024 * 1024),
        cost_estimate=cost,
    )(h1_flat,
      w2p.astype(compute_dtype),
      b2.reshape(1, -1).astype(jnp.float32),
      w3.astype(compute_dtype),
      b3.reshape(1, -1).astype(jnp.float32),
      res_nhwc)


# ---------------------------------------------------------------------------
# Bottleneck forward (downsample=None path)
# ---------------------------------------------------------------------------
def fold_bn(gamma, beta, mean, var, eps=1e-5):
    scale = gamma / jnp.sqrt(var + eps)
    return scale, beta - mean * scale


def bottleneck_forward(x_nchw, params, stride=1, dilation=1,
                       compute_dtype=jnp.bfloat16, row_tile=8):
    # downsample is None in this instantiation => stride == 1 and inplanes == 4*planes.
    assert stride == 1, "downsample=None Bottleneck path requires stride == 1"
    # TODO(synk): strided / downsample variant would need an extra strided-1x1 projection kernel.

    x = jnp.transpose(x_nchw, (0, 2, 3, 1))                    # NCHW -> NHWC (layout glue)
    N, H, W, Cin = x.shape
    P = params["w1"].shape[0]
    C4 = 4 * P
    assert Cin == C4, "downsample=None requires inplanes == 4*planes"

    s1, b1 = fold_bn(*params["bn1"])
    s2, b2 = fold_bn(*params["bn2"])
    s3, b3 = fold_bn(*params["bn3"])

    # Lane-dense intermediate channel count (>=128) for h1 / conv2 / conv3-lhs.
    Pp = _round_up(P, 128)

    # conv1 (1x1): fold bn1 scale, zero-pad output channels to Pp.
    w1m = jnp.transpose(params["w1"][:, :, 0, 0], (1, 0)) * s1[None, :]      # (Cin, P)
    w1m = jnp.pad(w1m, ((0, 0), (0, Pp - P)))
    b1p = jnp.pad(b1, (0, Pp - P))

    # conv2 (3x3): (ky,kx,Cin,Cout), fold bn2 scale, pad channels to Pp, pack kx along N.
    w2m = jnp.transpose(params["w2"], (2, 3, 1, 0)) * s2[None, None, None, :]  # (3,3,P,P)
    w2m = jnp.pad(w2m, ((0, 0), (0, 0), (0, Pp - P), (0, Pp - P)))
    w2p = jnp.concatenate([w2m[:, 0], w2m[:, 1], w2m[:, 2]], axis=-1)        # (3,Pp,3Pp)
    b2p = jnp.pad(b2, (0, Pp - P))

    # conv3 (1x1): fold bn3 scale, zero-pad input channels to Pp.
    w3m = jnp.transpose(params["w3"][:, :, 0, 0], (1, 0)) * s3[None, :]      # (P, C4)
    w3m = jnp.pad(w3m, ((0, Pp - P), (0, 0)))

    # Single cast of x to the MXU compute dtype: it is both the conv1 input (flat rows)
    # and the kernel-2 residual (unpadded NHWC row blocks) -> no extra residual pass.
    xc = x.astype(compute_dtype)

    # conv1 + bn1 + relu as one big lane-dense matmul.
    h1 = matmul_bias_relu(xc.reshape(N * H * W, Cin), w1m, b1p, out_dtype=compute_dtype)

    # Zero-pad h1 into the (height+width)-padded, sublane-aligned slab that the in-kernel
    # 3x3 flat-window trick reads.  This is one extra pass over the *smallest* activation
    # (P channels); residual / output streams (C4 channels) stay unpadded.
    # TODO(synk): fold this pad into kernel 1's output BlockSpec (needs a pre-zeroed
    # aliased output slab) to remove the last wrapper-side pad.
    d = dilation
    Wp_a = _round_up(W + 2 * d, 8)              # keeps ky*d*Wp_a tap offsets 8-aligned
    h1p = jnp.pad(h1.reshape(N, H, W, Pp),
                  ((0, 0), (d, d + 1), (d, Wp_a - W - d), (0, 0)))
    h1_flat = h1p.reshape(N, (H + 2 * d + 1) * Wp_a, Pp)

    out = fused_conv2_conv3(h1_flat, w2p, b2p, w3m, b3, xc,
                            H=H, W=W, wp_a=Wp_a, dil=d,
                            compute_dtype=compute_dtype, th_max=row_tile)
    return jnp.transpose(out, (0, 3, 1, 2))     # NHWC -> NCHW (dtype = compute_dtype)


# ---------------------------------------------------------------------------
# Pure-JAX reference (for correctness check)
# ---------------------------------------------------------------------------
def ref_bottleneck(x, params, stride=1, dilation=1, eps=1e-5):
    def conv(x, w, stride=1, dilation=1, pad=0):
        return jax.lax.conv_general_dilated(
            x, w, (stride, stride), ((pad, pad), (pad, pad)),
            rhs_dilation=(dilation, dilation),
            dimension_numbers=("NCHW", "OIHW", "NCHW"))

    def bn(x, bn_params):
        g, b, m, v = bn_params
        c = lambda a: a[None, :, None, None]
        return (x - c(m)) / jnp.sqrt(c(v) + eps) * c(g) + c(b)

    out = jax.nn.relu(bn(conv(x, params["w1"]), params["bn1"]))
    out = jax.nn.relu(bn(conv(out, params["w2"], stride, dilation, pad=dilation),
                         params["bn2"]))
    out = bn(conv(out, params["w3"]), params["bn3"])
    return jax.nn.relu(out + x)


# ---------------------------------------------------------------------------
# Deterministic parameter construction
# ---------------------------------------------------------------------------
def make_params(key, inplanes, planes):
    ks = jax.random.split(key, 15)
    f = jnp.float32

    def bn_params(k0, k1, k2, k3, c):
        gamma = 1.0 + 0.1 * jax.random.normal(k0, (c,), f)
        beta = 0.1 * jax.random.normal(k1, (c,), f)
        mean = 0.1 * jax.random.normal(k2, (c,), f)
        var = jnp.abs(jax.random.normal(k3, (c,), f)) + 0.5
        return (gamma, beta, mean, var)

    return {
        "w1": 0.2 * jax.random.normal(ks[0], (planes, inplanes, 1, 1), f),
        "bn1": bn_params(ks[1], ks[2], ks[3], ks[4], planes),
        "w2": 0.2 * jax.random.normal(ks[5], (planes, planes, 3, 3), f),
        "bn2": bn_params(ks[6], ks[7], ks[8], ks[9], planes),
        "w3": 0.2 * jax.random.normal(ks[10], (planes * 4, planes, 1, 1), f),
        "bn3": bn_params(ks[11], ks[12], ks[13], ks[14], planes * 4),
    }


if __name__ == "__main__":
    key = jax.random.PRNGKey(0)
    k_x, k_p = jax.random.split(key)

    inplanes, planes = 16, 4      # inplanes == planes*4 so the residual add is valid
    N, H, W = 2, 16, 16

    x = jax.random.normal(k_x, (N, inplanes, H, W), jnp.float32)   # NCHW, as PyTorch
    params = make_params(k_p, inplanes, planes)

    for dilation in (1, 2):
        ref = jax.block_until_ready(
            ref_bottleneck(x, params, stride=1, dilation=dilation))

        # Exact path: f32 MXU inputs -> tight check against the reference.
        out_f32 = jax.block_until_ready(
            bottleneck_forward(x, params, stride=1, dilation=dilation,
                               compute_dtype=jnp.float32))
        np.testing.assert_allclose(np.asarray(out_f32), np.asarray(ref),
                                   rtol=1e-4, atol=1e-4)

        # Perf path: bf16 MXU inputs / residual / output, f32 accumulation & epilogue.
        out_bf16 = jax.block_until_ready(
            bottleneck_forward(x, params, stride=1, dilation=dilation,
                               compute_dtype=jnp.bfloat16))
        np.testing.assert_allclose(np.asarray(out_bf16.astype(jnp.float32)),
                                   np.asarray(ref), rtol=1e-1, atol=1e-1)

    print("KERNEL_OK")
</pallas_src>

<mosaic_0001>
module attributes {stable_mosaic.version = 11 : i64} {
  func.func @_conv1x1_bn_relu_kernel(%arg0: i32, %arg1: memref<512x16xf32, #tpu.memory_space<vmem>>, %arg2: memref<16x128xf32, #tpu.memory_space<vmem>>, %arg3: memref<1x128xf32, #tpu.memory_space<vmem>>, %arg4: memref<512x128xf32, #tpu.memory_space<vmem>>) attributes {dimension_semantics = [#tpu.dimension_semantics<parallel>], iteration_bounds = array<i64: 1>, scalar_prefetch = 0 : i64, scratch_operands = 0 : i64, tpu.core_type = #tpu.core_type<tc>, window_params = [{transform_indices = @transform_0, window_bounds = array<i64: 512, 16>}, {pipeline_mode = #tpu.pipeline_mode<synchronous>, transform_indices = @transform_1, window_bounds = array<i64: 16, 128>}, {pipeline_mode = #tpu.pipeline_mode<synchronous>, transform_indices = @transform_2, window_bounds = array<i64: 1, 128>}, {transform_indices = @transform_3, window_bounds = array<i64: 512, 128>}]} {
    %c0 = arith.constant 0 : index
    %c0_0 = arith.constant 0 : index
    %0 = vector.load %arg1[%c0, %c0_0] : memref<512x16xf32, #tpu.memory_space<vmem>>, vector<512x16xf32>
    %c0_1 = arith.constant 0 : index
    %c0_2 = arith.constant 0 : index
    %1 = vector.load %arg2[%c0_1, %c0_2] : memref<16x128xf32, #tpu.memory_space<vmem>>, vector<16x128xf32>
    %cst = arith.constant dense<0.000000e+00> : vector<512x128xf32>
    %2 = tpu.matmul %0, %1, %cst {dimension_numbers = #tpu.dot_dimension_numbers<[1], [0], [0], [1], [0, 0, 1, 1], [], []>} : vector<512x16xf32>, vector<16x128xf32>, vector<512x128xf32> -> vector<512x128xf32>
    %c0_3 = arith.constant 0 : index
    %c0_4 = arith.constant 0 : index
    %3 = vector.load %arg3[%c0_3, %c0_4] : memref<1x128xf32, #tpu.memory_space<vmem>>, vector<1x128xf32>
    %4 = vector.broadcast %3 : vector<1x128xf32> to vector<512x128xf32>
    %5 = arith.addf %2, %4 : vector<512x128xf32>
    %cst_5 = arith.constant 0.000000e+00 : f32
    %6 = vector.broadcast %cst_5 : f32 to vector<512x128xf32>
    %7 = arith.maximumf %5, %6 : vector<512x128xf32>
    %c0_6 = arith.constant 0 : index
    %c0_7 = arith.constant 0 : index
    %8 = vector.load %arg4[%c0_6, %c0_7] : memref<512x128xf32, #tpu.memory_space<vmem>>, vector<512x128xf32>
    tpu.vector_store %arg4[%c0_6, %c0_7], %7 {strides = array<i32>} : memref<512x128xf32, #tpu.memory_space<vmem>>, vector<512x128xf32>,
    return
  }
  func.func @transform_0(%arg0: i32) -> (i32, i32) {
    %c0_i32 = arith.constant 0 : i32
    %c0_i32_0 = arith.constant 0 : i32
    return %arg0, %c0_i32 : i32, i32
  }
  func.func @transform_1(%arg0: i32) -> (i32, i32) {
    %c0_i32 = arith.constant 0 : i32
    %c0_i32_0 = arith.constant 0 : i32
    %c0_i32_1 = arith.constant 0 : i32
    return %c0_i32, %c0_i32_0 : i32, i32
  }
  func.func @transform_2(%arg0: i32) -> (i32, i32) {
    %c0_i32 = arith.constant 0 : i32
    %c0_i32_0 = arith.constant 0 : i32
    %c0_i32_1 = arith.constant 0 : i32
    return %c0_i32, %c0_i32_0 : i32, i32
  }
  func.func @transform_3(%arg0: i32) -> (i32, i32) {
    %c0_i32 = arith.constant 0 : i32
    %c0_i32_0 = arith.constant 0 : i32
    return %arg0, %c0_i32 : i32, i32
  }
}

</mosaic_0001>

<llo_original>
// kernel: tpu_custom_call.1
$region0: #{tpu_custom_call.1}
  #allocation0 [shape = 'u32[]', space=smem, size = 0x4, offset = 0x4, fixed_abs, tag = 'smem constant byte address 0x4 - core index']
  #allocation1 [shape = 'u32[144,128]{1,0:T(1,128)}', space=vmem, size = 0x12000, scoped, tag = 'internal scratch']
  %s0 = inlined_call_operand.vmem [shape: f32[512,16], index: 0, kind: input, shape index: {}]
  %s1 = inlined_call_operand.vmem [shape: f32[16,128], index: 1, kind: input, shape index: {}]
  %s2 = inlined_call_operand.vmem [shape: f32[1,128], index: 2, kind: input, shape index: {}]
  %s3 = inlined_call_operand.hbm [shape: f32[512,128], index: 3, kind: output, shape index: {}]
  %s4 = sld [smem:[#allocation0]]
  $region22: #{tpu_custom_call.1} parent=0
    _
  %s6 = ssub.s32 1, %s4
  %s7 = scalar_select 0, %s6, %s4
  $region1: #{tpu_custom_call.1} parent=0
    #allocation2 [shape = 'u8[262144]{0}', space=vmem, size = 0x40000, scoped, tag = 'output window, operand 0, single buffered']
    #allocation3 [shape = 's32[1]{0}', space=sflag, size = 0x4, scoped, tag = 'scoped memory for tpu_custom_call.1']
    %8 = vsyncpa [#allocation3], 0
    // Predicated region
    $region2: #{tpu_custom_call.1} parent=1 // pred_check
      _
    $region3: #{tpu_custom_call.1} parent=1 // pred_check_branch
      %10 = sbr.rel (0) target = $region5
    $region4: #{tpu_custom_call.1} parent=1 // pred_region
      _
    $region5: #{tpu_custom_call.1} parent=1 // pred_fallthru
      _
    // Predicated region
    $region6: #{tpu_custom_call.1} parent=1 // pred_check
      _
    $region7: #{tpu_custom_call.1} parent=1 // pred_check_branch
      %12 = sbr.rel (0) target = $region9
    $region8: #{tpu_custom_call.1} parent=1 // pred_region
      _
    $region9: #{tpu_custom_call.1} parent=1 // pred_fallthru
      _
    // Predicated region
    $region10: #{tpu_custom_call.1} parent=1 // pred_check
      _
    $region11: #{tpu_custom_call.1} parent=1 // pred_check_branch
      %14 = sbr.rel (0) target = $region13
    $region12: #{tpu_custom_call.1} parent=1 // pred_region
      _
    $region13: #{tpu_custom_call.1} parent=1 // pred_fallthru
      _
    %v15 = vld [vmem:[%s0] sm:$0xff]
    %v16 = vld [vmem:[%s0 + $0x8] sm:$0xff]
    %v17 = vld [vmem:[%s0 + $0x10] sm:$0xff]
    %v18 = vld [vmem:[%s0 + $0x18] sm:$0xff]
    %v19 = vld [vmem:[%s0 + $0x20] sm:$0xff]
    %v20 = vld [vmem:[%s0 + $0x28] sm:$0xff]
    %v21 = vld [vmem:[%s0 + $0x30] sm:$0xff]
    %v22 = vld [vmem:[%s0 + $0x38] sm:$0xff]
    %v23 = vld [vmem:[%s0 + $0x40] sm:$0xff]
    %v24 = vld [vmem:[%s0 + $0x48] sm:$0xff]
    %v25 = vld [vmem:[%s0 + $0x50] sm:$0xff]
    %v26 = vld [vmem:[%s0 + $0x58] sm:$0xff]
    %v27 = vld [vmem:[%s0 + $0x60] sm:$0xff]
    %v28 = vld [vmem:[%s0 + $0x68] sm:$0xff]
    %v29 = vld [vmem:[%s0 + $0x70] sm:$0xff]
    %v30 = vld [vmem:[%s0 + $0x78] sm:$0xff]
    %v31 = vld [vmem:[%s0 + $0x80] sm:$0xff]
    %v32 = vld [vmem:[%s0 + $0x88] sm:$0xff]
    %v33 = vld [vmem:[%s0 + $0x90] sm:$0xff]
    %v34 = vld [vmem:[%s0 + $0x98] sm:$0xff]
    %v35 = vld [vmem:[%s0 + $0xa0] sm:$0xff]
    %v36 = vld [vmem:[%s0 + $0xa8] sm:$0xff]
    %v37 = vld [vmem:[%s0 + $0xb0] sm:$0xff]
    %v38 = vld [vmem:[%s0 + $0xb8] sm:$0xff]
    %v39 = vld [vmem:[%s0 + $0xc0] sm:$0xff]
    %v40 = vld [vmem:[%s0 + $0xc8] sm:$0xff]
    %v41 = vld [vmem:[%s0 + $0xd0] sm:$0xff]
    %v42 = vld [vmem:[%s0 + $0xd8] sm:$0xff]
    %v43 = vld [vmem:[%s0 + $0xe0] sm:$0xff]
    %v44 = vld [vmem:[%s0 + $0xe8] sm:$0xff]
    %v45 = vld [vmem:[%s0 + $0xf0] sm:$0xff]
    %v46 = vld [vmem:[%s0 + $0xf8] sm:$0xff]
    %v47 = vld [vmem:[%s0 + $0x100] sm:$0xff]
    %v48 = vld [vmem:[%s0 + $0x108] sm:$0xff]
    %v49 = vld [vmem:[%s0 + $0x110] sm:$0xff]
    %v50 = vld [vmem:[%s0 + $0x118] sm:$0xff]
    %v51 = vld [vmem:[%s0 + $0x120] sm:$0xff]
    %v52 = vld [vmem:[%s0 + $0x128] sm:$0xff]
    %v53 = vld [vmem:[%s0 + $0x130] sm:$0xff]
    %v54 = vld [vmem:[%s0 + $0x138] sm:$0xff]
    %v55 = vld [vmem:[%s0 + $0x140] sm:$0xff]
    %v56 = vld [vmem:[%s0 + $0x148] sm:$0xff]
    %v57 = vld [vmem:[%s0 + $0x150] sm:$0xff]
    %v58 = vld [vmem:[%s0 + $0x158] sm:$0xff]
    %v59 = vld [vmem:[%s0 + $0x160] sm:$0xff]
    %v60 = vld [vmem:[%s0 + $0x168] sm:$0xff]
    %v61 = vld [vmem:[%s0 + $0x170] sm:$0xff]
    %v62 = vld [vmem:[%s0 + $0x178] sm:$0xff]
    %v63 = vld [vmem:[%s0 + $0x180] sm:$0xff]
    %v64 = vld [vmem:[%s0 + $0x188] sm:$0xff]
    %v65 = vld [vmem:[%s0 + $0x190] sm:$0xff]
    %v66 = vld [vmem:[%s0 + $0x198] sm:$0xff]
    %v67 = vld [vmem:[%s0 + $0x1a0] sm:$0xff]
    %v68 = vld [vmem:[%s0 + $0x1a8] sm:$0xff]
    %v69 = vld [vmem:[%s0 + $0x1b0] sm:$0xff]
    %v70 = vld [vmem:[%s0 + $0x1b8] sm:$0xff]
    %v71 = vld [vmem:[%s0 + $0x1c0] sm:$0xff]
    %v72 = vld [vmem:[%s0 + $0x1c8] sm:$0xff]
    %v73 = vld [vmem:[%s0 + $0x1d0] sm:$0xff]
    %v74 = vld [vmem:[%s0 + $0x1d8] sm:$0xff]
    %v75 = vld [vmem:[%s0 + $0x1e0] sm:$0xff]
    %v76 = vld [vmem:[%s0 + $0x1e8] sm:$0xff]
    %v77 = vld [vmem:[%s0 + $0x1f0] sm:$0xff]
    %v78 = vld [vmem:[%s0 + $0x1f8] sm:$0xff]
    %v79 = vld [vmem:[%s1] sm:$0xff]
    %v80 = vld [vmem:[%s1 + $0x8] sm:$0xff]
    %v81 = vld [vmem:[%s2] sm:$0x1]
    %v83 = vlaneseq
    %v84 = vshrl.u32 %v83, 7
    %v85 = vsub.s32 0, %v84
    %v86 = vrot.slane %v81, %v85
    %vm88 = vcmask 130048
    %v90 = vsel %vm88, %v15, 0
    %v93 = vsel %vm88, %v16, 0
    %v96 = vsel %vm88, %v17, 0
    %v99 = vsel %vm88, %v18, 0
    %v102 = vsel %vm88, %v19, 0
    %v105 = vsel %vm88, %v20, 0
    %v108 = vsel %vm88, %v21, 0
    %v111 = vsel %vm88, %v22, 0
    %v114 = vsel %vm88, %v23, 0
    %v117 = vsel %vm88, %v24, 0
    %v120 = vsel %vm88, %v25, 0
    %v123 = vsel %vm88, %v26, 0
    %v126 = vsel %vm88, %v27, 0
    %v129 = vsel %vm88, %v28, 0
    %v132 = vsel %vm88, %v29, 0
    %v135 = vsel %vm88, %v30, 0
    %v138 = vsel %vm88, %v31, 0
    %v141 = vsel %vm88, %v32, 0
    %v144 = vsel %vm88, %v33, 0
    %v147 = vsel %vm88, %v34, 0
    %v150 = vsel %vm88, %v35, 0
    %v153 = vsel %vm88, %v36, 0
    %v156 = vsel %vm88, %v37, 0
    %v159 = vsel %vm88, %v38, 0
    %v162 = vsel %vm88, %v39, 0
    %v165 = vsel %vm88, %v40, 0
    %v168 = vsel %vm88, %v41, 0
    %v171 = vsel %vm88, %v42, 0
    %v174 = vsel %vm88, %v43, 0
    %v177 = vsel %vm88, %v44, 0
    %v180 = vsel %vm88, %v45, 0
    %v183 = vsel %vm88, %v46, 0
    %v186 = vsel %vm88, %v47, 0
    %v189 = vsel %vm88, %v48, 0
    %v192 = vsel %vm88, %v49, 0
    %v195 = vsel %vm88, %v50, 0
    %v198 = vsel %vm88, %v51, 0
    %v201 = vsel %vm88, %v52, 0
    %v204 = vsel %vm88, %v53, 0
    %v207 = vsel %vm88, %v54, 0
    %v210 = vsel %vm88, %v55, 0
    %v213 = vsel %vm88, %v56, 0
    %v216 = vsel %vm88, %v57, 0
    %v219 = vsel %vm88, %v58, 0
    %v222 = vsel %vm88, %v59, 0
    %v225 = vsel %vm88, %v60, 0
    %v228 = vsel %vm88, %v61, 0
    %v231 = vsel %vm88, %v62, 0
    %v234 = vsel %vm88, %v63, 0
    %v237 = vsel %vm88, %v64, 0
    %v240 = vsel %vm88, %v65, 0
    %v243 = vsel %vm88, %v66, 0
    %v246 = vsel %vm88, %v67, 0
    %v249 = vsel %vm88, %v68, 0
    %v252 = vsel %vm88, %v69, 0
    %v255 = vsel %vm88, %v70, 0
    %v258 = vsel %vm88, %v71, 0
    %v261 = vsel %vm88, %v72, 0
    %v264 = vsel %vm88, %v73, 0
    %v267 = vsel %vm88, %v74, 0
    %v270 = vsel %vm88, %v75, 0
    %v273 = vsel %vm88, %v76, 0
    %v276 = vsel %vm88, %v77, 0
    %v279 = vsel %vm88, %v78, 0
    %281 = vmatprep.subr.mxu0 0.0
    %282 = vmatpush1.msra.mxu0 %v79
    %283 = vmatprep.subr.mxu0 0.0
    %284 = vmatpush1.msra.mxu0 %v80
    %285 = vmatprep.subr.mxu0 0.0
    %286 = vmatpush1.msra.mxu0 0.0
    %287 = vmatprep.subr.mxu0 0.0
    %288 = vmatpush1.msra.mxu0 0.0
    %289 = vmatprep.subr.mxu0 0.0
    %290 = vmatpush1.msra.mxu0 0.0
    %291 = vmatprep.subr.mxu0 0.0
    %292 = vmatpush1.msra.mxu0 0.0
    %293 = vmatprep.subr.mxu0 0.0
    %294 = vmatpush1.msra.mxu0 0.0
    %295 = vmatprep.subr.mxu0 0.0
    %296 = vmatpush1.msra.mxu0 0.0
    %297 = vmatprep.subr.mxu0 0.0
    %298 = vmatpush1.msra.mxu0 0.0
    %299 = vmatprep.subr.mxu0 0.0
    %300 = vmatpush1.msra.mxu0 0.0
    %301 = vmatprep.subr.mxu0 0.0
    %302 = vmatpush1.msra.mxu0 0.0
    %303 = vmatprep.subr.mxu0 0.0
    %304 = vmatpush1.msra.mxu0 0.0
    %305 = vmatprep.subr.mxu0 0.0
    %306 = vmatpush1.msra.mxu0 0.0
    %307 = vmatprep.subr.mxu0 0.0
    %308 = vmatpush1.msra.mxu0 0.0
    %309 = vmatprep.subr.mxu0 0.0
    %310 = vmatpush1.msra.mxu0 0.0
    %311 = vmatprep.subr.mxu0 0.0
    %312 = vmatpush1.msra.mxu0 0.0
    %313 = vmatprep.subr.mxu0 0.0
    %314 = vmatpush1.msra.mxu0 0.0
    %315 = vmatprep.subr.mxu0 0.0
    %316 = vmatpush1.msra.mxu0 0.0
    %317 = vmatprep.subr.mxu0 0.0
    %318 = vmatpush1.msra.mxu0 0.0
    %319 = vmatprep.subr.mxu0 0.0
    %320 = vmatpush1.msra.mxu0 0.0
    %321 = vmatprep.subr.mxu0 0.0
    %322 = vmatpush1.msra.mxu0 0.0
    %323 = vmatprep.subr.mxu0 0.0
    %324 = vmatpush1.msra.mxu0 0.0
    %325 = vmatprep.subr.mxu0 0.0
    %326 = vmatpush1.msra.mxu0 0.0
    %327 = vmatprep.subr.mxu0 0.0
    %328 = vmatpush1.msra.mxu0 0.0
    %329 = vmatprep.subr.mxu0 0.0
    %330 = vmatpush1.msra.mxu0 0.0
    %331 = vmatprep.subr.mxu0 0.0
    %332 = vmatpush1.msra.mxu0 0.0
    %333 = vmatprep.subr.mxu0 0.0
    %334 = vmatpush1.msra.mxu0 0.0
    %335 = vmatprep.subr.mxu0 0.0
    %336 = vmatpush1.msra.mxu0 0.0
    %337 = vmatprep.subr.mxu0 0.0
    %338 = vmatpush1.msra.mxu0 0.0
    %339 = vmatprep.subr.mxu0 0.0
    %340 = vmatpush1.msra.mxu0 0.0
    %341 = vmatprep.subr.mxu0 0.0
    %342 = vmatpush1.msra.mxu0 0.0
    %343 = vmatprep.subr.mxu0 0.0
    %344 = vmatpush1.msra.mxu0 0.0
    %345 = vmatprep.mubr.f32.mxu0 0.0
    %346 = vmatmul.mubr.f32.gmra.mrb[0].mxu0 %v90
    %v347 = vpop.f32.mrb[0].mxu0
    %v348 = vadd.f32 %v86, %v347
    %v349 = vpop.f32.mrb[0].mxu0
    %350 = vmatprep.mubr.f32.mxu0 0.0
    %351 = vmatmul.mubr.f32.gmra.mrb[0].mxu0 %v93
    %v352 = vpop.f32.mrb[0].mxu0
    %v353 = vadd.f32 %v86, %v352
    %v354 = vpop.f32.mrb[0].mxu0
    %355 = vmatprep.mubr.f32.mxu0 0.0
    %356 = vmatmul.mubr.f32.gmra.mrb[0].mxu0 %v96
    %v357 = vpop.f32.mrb[0].mxu0
    %v358 = vadd.f32 %v86, %v357
    %v359 = vpop.f32.mrb[0].mxu0
    %360 = vmatprep.mubr.f32.mxu0 0.0
    %361 = vmatmul.mubr.f32.gmra.mrb[0].mxu0 %v99
    %v362 = vpop.f32.mrb[0].mxu0
    %v363 = vadd.f32 %v86, %v362
    %v364 = vpop.f32.mrb[0].mxu0
    %365 = vmatprep.mubr.f32.mxu0 0.0
    %366 = vmatmul.mubr.f32.gmra.mrb[0].mxu0 %v102
    %v367 = vpop.f32.mrb[0].mxu0
    %v368 = vadd.f32 %v86, %v367
    %v369 = vpop.f32.mrb[0].mxu0
    %370 = vmatprep.mubr.f32.mxu0 0.0
    %371 = vmatmul.mubr.f32.gmra.mrb[0].mxu0 %v105
    %v372 = vpop.f32.mrb[0].mxu0
    %v373 = vadd.f32 %v86, %v372
    %v374 = vpop.f32.mrb[0].mxu0
    %375 = vmatprep.mubr.f32.mxu0 0.0
    %376 = vmatmul.mubr.f32.gmra.mrb[0].mxu0 %v108
    %v377 = vpop.f32.mrb[0].mxu0
    %v378 = vadd.f32 %v86, %v377
    %v379 = vpop.f32.mrb[0].mxu0
    %380 = vmatprep.mubr.f32.mxu0 0.0
    %381 = vmatmul.mubr.f32.gmra.mrb[0].mxu0 %v111
    %v382 = vpop.f32.mrb[0].mxu0
    %v383 = vadd.f32 %v86, %v382
    %v384 = vpop.f32.mrb[0].mxu0
    %385 = vmatprep.mubr.f32.mxu0 0.0
    %386 = vmatmul.mubr.f32.gmra.mrb[0].mxu0 %v114
    %v387 = vpop.f32.mrb[0].mxu0
    %v388 = vadd.f32 %v86, %v387
    %v389 = vpop.f32.mrb[0].mxu0
    %390 = vmatprep.mubr.f32.mxu0 0.0
    %391 = vmatmul.mubr.f32.gmra.mrb[0].mxu0 %v117
    %v392 = vpop.f32.mrb[0].mxu0
    %v393 = vadd.f32 %v86, %v392
    %v394 = vpop.f32.mrb[0].mxu0
    %395 = vmatprep.mubr.f32.mxu0 0.0
    %396 = vmatmul.mubr.f32.gmra.mrb[0].mxu0 %v120
    %v397 = vpop.f32.mrb[0].mxu0
    %v398 = vadd.f32 %v86, %v397
    %v399 = vpop.f32.mrb[0].mxu0
    %400 = vmatprep.mubr.f32.mxu0 0.0
    %401 = vmatmul.mubr.f32.gmra.mrb[0].mxu0 %v123
    %v402 = vpop.f32.mrb[0].mxu0
    %v403 = vadd.f32 %v86, %v402
    %v404 = vpop.f32.mrb[0].mxu0
    %405 = vmatprep.mubr.f32.mxu0 0.0
    %406 = vmatmul.mubr.f32.gmra.mrb[0].mxu0 %v126
    %v407 = vpop.f32.mrb[0].mxu0
    %v408 = vadd.f32 %v86, %v407
    %v409 = vpop.f32.mrb[0].mxu0
    %410 = vmatprep.mubr.f32.mxu0 0.0
    %411 = vmatmul.mubr.f32.gmra.mrb[0].mxu0 %v129
    %v412 = vpop.f32.mrb[0].mxu0
    %v413 = vadd.f32 %v86, %v412
    %v414 = vpop.f32.mrb[0].mxu0
    %415 = vmatprep.mubr.f32.mxu0 0.0
    %416 = vmatmul.mubr.f32.gmra.mrb[0].mxu0 %v132
    %v417 = vpop.f32.mrb[0].mxu0
    %v418 = vadd.f32 %v86, %v417
    %v419 = vpop.f32.mrb[0].mxu0
    %420 = vmatprep.mubr.f32.mxu0 0.0
    %421 = vmatmul.mubr.f32.gmra.mrb[0].mxu0 %v135
    %v422 = vpop.f32.mrb[0].mxu0
    %v423 = vadd.f32 %v86, %v422
    %v424 = vpop.f32.mrb[0].mxu0
    %425 = vmatprep.mubr.f32.mxu0 0.0
    %426 = vmatmul.mubr.f32.gmra.mrb[0].mxu0 %v138
    %v427 = vpop.f32.mrb[0].mxu0
    %v428 = vadd.f32 %v86, %v427
    %v429 = vpop.f32.mrb[0].mxu0
    %430 = vmatprep.mubr.f32.mxu0 0.0
    %431 = vmatmul.mubr.f32.gmra.mrb[0].mxu0 %v141
    %v432 = vpop.f32.mrb[0].mxu0
    %v433 = vadd.f32 %v86, %v432
    %v434 = vpop.f32.mrb[0].mxu0
    %435 = vmatprep.mubr.f32.mxu0 0.0
    %436 = vmatmul.mubr.f32.gmra.mrb[0].mxu0 %v144
    %v437 = vpop.f32.mrb[0].mxu0
    %v438 = vadd.f32 %v86, %v437
    %v439 = vpop.f32.mrb[0].mxu0
    %440 = vmatprep.mubr.f32.mxu0 0.0
    %441 = vmatmul.mubr.f32.gmra.mrb[0].mxu0 %v147
    %v442 = vpop.f32.mrb[0].mxu0
    %v443 = vadd.f32 %v86, %v442
    %v444 = vpop.f32.mrb[0].mxu0
    %445 = vmatprep.mubr.f32.mxu0 0.0
    %446 = vmatmul.mubr.f32.gmra.mrb[0].mxu0 %v150
    %v447 = vpop.f32.mrb[0].mxu0
    %v448 = vadd.f32 %v86, %v447
    %v449 = vpop.f32.mrb[0].mxu0
    %450 = vmatprep.mubr.f32.mxu0 0.0
    %451 = vmatmul.mubr.f32.gmra.mrb[0].mxu0 %v153
    %v452 = vpop.f32.mrb[0].mxu0
    %v453 = vadd.f32 %v86, %v452
    %v454 = vpop.f32.mrb[0].mxu0
    %455 = vmatprep.mubr.f32.mxu0 0.0
    %456 = vmatmul.mubr.f32.gmra.mrb[0].mxu0 %v156
    %v457 = vpop.f32.mrb[0].mxu0
    %v458 = vadd.f32 %v86, %v457
    %v459 = vpop.f32.mrb[0].mxu0
    %460 = vmatprep.mubr.f32.mxu0 0.0
    %461 = vmatmul.mubr.f32.gmra.mrb[0].mxu0 %v159
    %v462 = vpop.f32.mrb[0].mxu0
    %v463 = vadd.f32 %v86, %v462
    %v464 = vpop.f32.mrb[0].mxu0
    %465 = vmatprep.mubr.f32.mxu0 0.0
    %466 = vmatmul.mubr.f32.gmra.mrb[0].mxu0 %v162
    %v467 = vpop.f32.mrb[0].mxu0
    %v468 = vadd.f32 %v86, %v467
    %v469 = vpop.f32.mrb[0].mxu0
    %470 = vmatprep.mubr.f32.mxu0 0.0
    %471 = vmatmul.mubr.f32.gmra.mrb[0].mxu0 %v165
    %v472 = vpop.f32.mrb[0].mxu0
    %v473 = vadd.f32 %v86, %v472
    %v474 = vpop.f32.mrb[0].mxu0
    %475 = vmatprep.mubr.f32.mxu0 0.0
    %476 = vmatmul.mubr.f32.gmra.mrb[0].mxu0 %v168
    %v477 = vpop.f32.mrb[0].mxu0
    %v478 = vadd.f32 %v86, %v477
    %v479 = vpop.f32.mrb[0].mxu0
    %480 = vmatprep.mubr.f32.mxu0 0.0
    %481 = vmatmul.mubr.f32.gmra.mrb[0].mxu0 %v171
    %v482 = vpop.f32.mrb[0].mxu0
    %v483 = vadd.f32 %v86, %v482
    %v484 = vpop.f32.mrb[0].mxu0
    %485 = vmatprep.mubr.f32.mxu0 0.0
    %486 = vmatmul.mubr.f32.gmra.mrb[0].mxu0 %v174
    %v487 = vpop.f32.mrb[0].mxu0
    %v488 = vadd.f32 %v86, %v487
    %v489 = vpop.f32.mrb[0].mxu0
    %490 = vmatprep.mubr.f32.mxu0 0.0
    %491 = vmatmul.mubr.f32.gmra.mrb[0].mxu0 %v177
    %v492 = vpop.f32.mrb[0].mxu0
    %v493 = vadd.f32 %v86, %v492
    %v494 = vpop.f32.mrb[0].mxu0
    %495 = vmatprep.mubr.f32.mxu0 0.0
    %496 = vmatmul.mubr.f32.gmra.mrb[0].mxu0 %v180
    %v497 = vpop.f32.mrb[0].mxu0
    %v498 = vadd.f32 %v86, %v497
    %v499 = vpop.f32.mrb[0].mxu0
    %500 = vmatprep.mubr.f32.mxu0 0.0
    %501 = vmatmul.mubr.f32.gmra.mrb[0].mxu0 %v183
    %v502 = vpop.f32.mrb[0].mxu0
    %v503 = vadd.f32 %v86, %v502
    %v504 = vpop.f32.mrb[0].mxu0
    %505 = vmatprep.mubr.f32.mxu0 0.0
    %506 = vmatmul.mubr.f32.gmra.mrb[0].mxu0 %v186
    %v507 = vpop.f32.mrb[0].mxu0
    %v508 = vadd.f32 %v86, %v507
    %v509 = vpop.f32.mrb[0].mxu0
    %510 = vmatprep.mubr.f32.mxu0 0.0
    %511 = vmatmul.mubr.f32.gmra.mrb[0].mxu0 %v189
    %v512 = vpop.f32.mrb[0].mxu0
    %v513 = vadd.f32 %v86, %v512
    %v514 = vpop.f32.mrb[0].mxu0
    %515 = vmatprep.mubr.f32.mxu0 0.0
    %516 = vmatmul.mubr.f32.gmra.mrb[0].mxu0 %v192
    %v517 = vpop.f32.mrb[0].mxu0
    %v518 = vadd.f32 %v86, %v517
    %v519 = vpop.f32.mrb[0].mxu0
    %520 = vmatprep.mubr.f32.mxu0 0.0
    %521 = vmatmul.mubr.f32.gmra.mrb[0].mxu0 %v195
    %v522 = vpop.f32.mrb[0].mxu0
    %v523 = vadd.f32 %v86, %v522
    %v524 = vpop.f32.mrb[0].mxu0
    %525 = vmatprep.mubr.f32.mxu0 0.0
    %526 = vmatmul.mubr.f32.gmra.mrb[0].mxu0 %v198
    %v527 = vpop.f32.mrb[0].mxu0
    %v528 = vadd.f32 %v86, %v527
    %v529 = vpop.f32.mrb[0].mxu0
    %530 = vmatprep.mubr.f32.mxu0 0.0
    %531 = vmatmul.mubr.f32.gmra.mrb[0].mxu0 %v201
    %v532 = vpop.f32.mrb[0].mxu0
    %v533 = vadd.f32 %v86, %v532
    %v534 = vpop.f32.mrb[0].mxu0
    %535 = vmatprep.mubr.f32.mxu0 0.0
    %536 = vmatmul.mubr.f32.gmra.mrb[0].mxu0 %v204
    %v537 = vpop.f32.mrb[0].mxu0
    %v538 = vadd.f32 %v86, %v537
    %v539 = vpop.f32.mrb[0].mxu0
    %540 = vmatprep.mubr.f32.mxu0 0.0
    %541 = vmatmul.mubr.f32.gmra.mrb[0].mxu0 %v207
    %v542 = vpop.f32.mrb[0].mxu0
    %v543 = vadd.f32 %v86, %v542
    %v544 = vpop.f32.mrb[0].mxu0
    %545 = vmatprep.mubr.f32.mxu0 0.0
    %546 = vmatmul.mubr.f32.gmra.mrb[0].mxu0 %v210
    %v547 = vpop.f32.mrb[0].mxu0
    %v548 = vadd.f32 %v86, %v547
    %v549 = vpop.f32.mrb[0].mxu0
    %550 = vmatprep.mubr.f32.mxu0 0.0
    %551 = vmatmul.mubr.f32.gmra.mrb[0].mxu0 %v213
    %v552 = vpop.f32.mrb[0].mxu0
    %v553 = vadd.f32 %v86, %v552
    %v554 = vpop.f32.mrb[0].mxu0
    %555 = vmatprep.mubr.f32.mxu0 0.0
    %556 = vmatmul.mubr.f32.gmra.mrb[0].mxu0 %v216
    %v557 = vpop.f32.mrb[0].mxu0
    %v558 = vadd.f32 %v86, %v557
    %v559 = vpop.f32.mrb[0].mxu0
    %560 = vmatprep.mubr.f32.mxu0 0.0
    %561 = vmatmul.mubr.f32.gmra.mrb[0].mxu0 %v219
    %v562 = vpop.f32.mrb[0].mxu0
    %v563 = vadd.f32 %v86, %v562
    %v564 = vpop.f32.mrb[0].mxu0
    %565 = vmatprep.mubr.f32.mxu0 0.0
    %566 = vmatmul.mubr.f32.gmra.mrb[0].mxu0 %v222
    %v567 = vpop.f32.mrb[0].mxu0
    %v568 = vadd.f32 %v86, %v567
    %v569 = vpop.f32.mrb[0].mxu0
    %570 = vmatprep.mubr.f32.mxu0 0.0
    %571 = vmatmul.mubr.f32.gmra.mrb[0].mxu0 %v225
    %v572 = vpop.f32.mrb[0].mxu0
    %v573 = vadd.f32 %v86, %v572
    %v574 = vpop.f32.mrb[0].mxu0
    %575 = vmatprep.mubr.f32.mxu0 0.0
    %576 = vmatmul.mubr.f32.gmra.mrb[0].mxu0 %v228
    %v577 = vpop.f32.mrb[0].mxu0
    %v578 = vadd.f32 %v86, %v577
    %v579 = vpop.f32.mrb[0].mxu0
    %580 = vmatprep.mubr.f32.mxu0 0.0
    %581 = vmatmul.mubr.f32.gmra.mrb[0].mxu0 %v231
    %v582 = vpop.f32.mrb[0].mxu0
    %v583 = vadd.f32 %v86, %v582
    %v584 = vpop.f32.mrb[0].mxu0
    %585 = vmatprep.mubr.f32.mxu0 0.0
    %586 = vmatmul.mubr.f32.gmra.mrb[0].mxu0 %v234
    %v587 = vpop.f32.mrb[0].mxu0
    %v588 = vadd.f32 %v86, %v587
    %v589 = vpop.f32.mrb[0].mxu0
    %590 = vmatprep.mubr.f32.mxu0 0.0
    %591 = vmatmul.mubr.f32.gmra.mrb[0].mxu0 %v237
    %v592 = vpop.f32.mrb[0].mxu0
    %v593 = vadd.f32 %v86, %v592
    %v594 = vpop.f32.mrb[0].mxu0
    %595 = vmatprep.mubr.f32.mxu0 0.0
    %596 = vmatmul.mubr.f32.gmra.mrb[0].mxu0 %v240
    %v597 = vpop.f32.mrb[0].mxu0
    %v598 = vadd.f32 %v86, %v597
    %v599 = vpop.f32.mrb[0].mxu0
    %600 = vmatprep.mubr.f32.mxu0 0.0
    %601 = vmatmul.mubr.f32.gmra.mrb[0].mxu0 %v243
    %v602 = vpop.f32.mrb[0].mxu0
    %v603 = vadd.f32 %v86, %v602
    %v604 = vpop.f32.mrb[0].mxu0
    %605 = vmatprep.mubr.f32.mxu0 0.0
    %606 = vmatmul.mubr.f32.gmra.mrb[0].mxu0 %v246
    %v607 = vpop.f32.mrb[0].mxu0
    %v608 = vadd.f32 %v86, %v607
    %v609 = vpop.f32.mrb[0].mxu0
    %610 = vmatprep.mubr.f32.mxu0 0.0
    %611 = vmatmul.mubr.f32.gmra.mrb[0].mxu0 %v249
    %v612 = vpop.f32.mrb[0].mxu0
    %v613 = vadd.f32 %v86, %v612
    %v614 = vpop.f32.mrb[0].mxu0
    %615 = vmatprep.mubr.f32.mxu0 0.0
    %616 = vmatmul.mubr.f32.gmra.mrb[0].mxu0 %v252
    %v617 = vpop.f32.mrb[0].mxu0
    %v618 = vadd.f32 %v86, %v617
    %v619 = vpop.f32.mrb[0].mxu0
    %620 = vmatprep.mubr.f32.mxu0 0.0
    %621 = vmatmul.mubr.f32.gmra.mrb[0].mxu0 %v255
    %v622 = vpop.f32.mrb[0].mxu0
    %v623 = vadd.f32 %v86, %v622
    %v624 = vpop.f32.mrb[0].mxu0
    %625 = vmatprep.mubr.f32.mxu0 0.0
    %626 = vmatmul.mubr.f32.gmra.mrb[0].mxu0 %v258
    %v627 = vpop.f32.mrb[0].mxu0
    %v628 = vadd.f32 %v86, %v627
    %v629 = vpop.f32.mrb[0].mxu0
    %630 = vmatprep.mubr.f32.mxu0 0.0
    %631 = vmatmul.mubr.f32.gmra.mrb[0].mxu0 %v261
    %v632 = vpop.f32.mrb[0].mxu0
    %v633 = vadd.f32 %v86, %v632
    %v634 = vpop.f32.mrb[0].mxu0
    %635 = vmatprep.mubr.f32.mxu0 0.0
    %636 = vmatmul.mubr.f32.gmra.mrb[0].mxu0 %v264
    %v637 = vpop.f32.mrb[0].mxu0
    %v638 = vadd.f32 %v86, %v637
    %v639 = vpop.f32.mrb[0].mxu0
    %640 = vmatprep.mubr.f32.mxu0 0.0
    %641 = vmatmul.mubr.f32.gmra.mrb[0].mxu0 %v267
    %v642 = vpop.f32.mrb[0].mxu0
    %v643 = vadd.f32 %v86, %v642
    %v644 = vpop.f32.mrb[0].mxu0
    %645 = vmatprep.mubr.f32.mxu0 0.0
    %646 = vmatmul.mubr.f32.gmra.mrb[0].mxu0 %v270
    %v647 = vpop.f32.mrb[0].mxu0
    %v648 = vadd.f32 %v86, %v647
    %v649 = vpop.f32.mrb[0].mxu0
    %650 = vmatprep.mubr.f32.mxu0 0.0
    %651 = vmatmul.mubr.f32.gmra.mrb[0].mxu0 %v273
    %v652 = vpop.f32.mrb[0].mxu0
    %v653 = vadd.f32 %v86, %v652
    %v654 = vpop.f32.mrb[0].mxu0
    %655 = vmatprep.mubr.f32.mxu0 0.0
    %656 = vmatmul.mubr.f32.gmra.mrb[0].mxu0 %v276
    %v657 = vpop.f32.mrb[0].mxu0
    %v658 = vadd.f32 %v86, %v657
    %v659 = vpop.f32.mrb[0].mxu0
    %660 = vmatprep.mubr.f32.mxu0 0.0
    %661 = vmatmul.mubr.f32.gmra.mrb[0].mxu0 %v279
    %v662 = vpop.f32.mrb[0].mxu0
    %v663 = vadd.f32 %v86, %v662
    %v664 = vpop.f32.mrb[0].mxu0
    %665 = vdwg.mxu0
    %v666 = vmax.f32 %v348, 0.0
    %v667 = vmax.f32 %v353, 0.0
    %v668 = vmax.f32 %v358, 0.0
    %v669 = vmax.f32 %v363, 0.0
    %v670 = vmax.f32 %v368, 0.0
    %v671 = vmax.f32 %v373, 0.0
    %v672 = vmax.f32 %v378, 0.0
    %v673 = vmax.f32 %v383, 0.0
    %v674 = vmax.f32 %v388, 0.0
    %v675 = vmax.f32 %v393, 0.0
    %v676 = vmax.f32 %v398, 0.0
    %v677 = vmax.f32 %v403, 0.0
    %v678 = vmax.f32 %v408, 0.0
    %v679 = vmax.f32 %v413, 0.0
    %v680 = vmax.f32 %v418, 0.0
    %v681 = vmax.f32 %v423, 0.0
    %v682 = vmax.f32 %v428, 0.0
    %v683 = vmax.f32 %v433, 0.0
    %v684 = vmax.f32 %v438, 0.0
    %v685 = vmax.f32 %v443, 0.0
    %v686 = vmax.f32 %v448, 0.0
    %v687 = vmax.f32 %v453, 0.0
    %v688 = vmax.f32 %v458, 0.0
    %v689 = vmax.f32 %v463, 0.0
    %v690 = vmax.f32 %v468, 0.0
    %v691 = vmax.f32 %v473, 0.0
    %v692 = vmax.f32 %v478, 0.0
    %v693 = vmax.f32 %v483, 0.0
    %v694 = vmax.f32 %v488, 0.0
    %v695 = vmax.f32 %v493, 0.0
    %v696 = vmax.f32 %v498, 0.0
    %v697 = vmax.f32 %v503, 0.0
    %v698 = vmax.f32 %v508, 0.0
    %v699 = vmax.f32 %v513, 0.0
    %v700 = vmax.f32 %v518, 0.0
    %v701 = vmax.f32 %v523, 0.0
    %v702 = vmax.f32 %v528, 0.0
    %v703 = vmax.f32 %v533, 0.0
    %v704 = vmax.f32 %v538, 0.0
    %v705 = vmax.f32 %v543, 0.0
    %v706 = vmax.f32 %v548, 0.0
    %v707 = vmax.f32 %v553, 0.0
    %v708 = vmax.f32 %v558, 0.0
    %v709 = vmax.f32 %v563, 0.0
    %v710 = vmax.f32 %v568, 0.0
    %v711 = vmax.f32 %v573, 0.0
    %v712 = vmax.f32 %v578, 0.0
    %v713 = vmax.f32 %v583, 0.0
    %v714 = vmax.f32 %v588, 0.0
    %v715 = vmax.f32 %v593, 0.0
    %v716 = vmax.f32 %v598, 0.0
    %v717 = vmax.f32 %v603, 0.0
    %v718 = vmax.f32 %v608, 0.0
    %v719 = vmax.f32 %v613, 0.0
    %v720 = vmax.f32 %v618, 0.0
    %v721 = vmax.f32 %v623, 0.0
    %v722 = vmax.f32 %v628, 0.0
    %v723 = vmax.f32 %v633, 0.0
    %v724 = vmax.f32 %v638, 0.0
    %v725 = vmax.f32 %v643, 0.0
    %v726 = vmax.f32 %v648, 0.0
    %v727 = vmax.f32 %v653, 0.0
    %v728 = vmax.f32 %v658, 0.0
    %v729 = vmax.f32 %v663, 0.0
    %730 = vst [vmem:[#allocation2] sm:$0xff] %v666
    %731 = vst [vmem:[#allocation2 + $0x8] sm:$0xff] %v667
    %732 = vst [vmem:[#allocation2 + $0x10] sm:$0xff] %v668
    %733 = vst [vmem:[#allocation2 + $0x18] sm:$0xff] %v669
    %734 = vst [vmem:[#allocation2 + $0x20] sm:$0xff] %v670
    %735 = vst [vmem:[#allocation2 + $0x28] sm:$0xff] %v671
    %736 = vst [vmem:[#allocation2 + $0x30] sm:$0xff] %v672
    %737 = vst [vmem:[#allocation2 + $0x38] sm:$0xff] %v673
    %738 = vst [vmem:[#allocation2 + $0x40] sm:$0xff] %v674
    %739 = vst [vmem:[#allocation2 + $0x48] sm:$0xff] %v675
    %740 = vst [vmem:[#allocation2 + $0x50] sm:$0xff] %v676
    %741 = vst [vmem:[#allocation2 + $0x58] sm:$0xff] %v677
    %742 = vst [vmem:[#allocation2 + $0x60] sm:$0xff] %v678
    %743 = vst [vmem:[#allocation2 + $0x68] sm:$0xff] %v679
    %744 = vst [vmem:[#allocation2 + $0x70] sm:$0xff] %v680
    %745 = vst [vmem:[#allocation2 + $0x78] sm:$0xff] %v681
    %746 = vst [vmem:[#allocation2 + $0x80] sm:$0xff] %v682
    %747 = vst [vmem:[#allocation2 + $0x88] sm:$0xff] %v683
    %748 = vst [vmem:[#allocation2 + $0x90] sm:$0xff] %v684
    %749 = vst [vmem:[#allocation2 + $0x98] sm:$0xff] %v685
    %750 = vst [vmem:[#allocation2 + $0xa0] sm:$0xff] %v686
    %751 = vst [vmem:[#allocation2 + $0xa8] sm:$0xff] %v687
    %752 = vst [vmem:[#allocation2 + $0xb0] sm:$0xff] %v688
    %753 = vst [vmem:[#allocation2 + $0xb8] sm:$0xff] %v689
    %754 = vst [vmem:[#allocation2 + $0xc0] sm:$0xff] %v690
    %755 = vst [vmem:[#allocation2 + $0xc8] sm:$0xff] %v691
    %756 = vst [vmem:[#allocation2 + $0xd0] sm:$0xff] %v692
    %757 = vst [vmem:[#allocation2 + $0xd8] sm:$0xff] %v693
    %758 = vst [vmem:[#allocation2 + $0xe0] sm:$0xff] %v694
    %759 = vst [vmem:[#allocation2 + $0xe8] sm:$0xff] %v695
    %760 = vst [vmem:[#allocation2 + $0xf0] sm:$0xff] %v696
    %761 = vst [vmem:[#allocation2 + $0xf8] sm:$0xff] %v697
    %762 = vst [vmem:[#allocation2 + $0x100] sm:$0xff] %v698
    %763 = vst [vmem:[#allocation2 + $0x108] sm:$0xff] %v699
    %764 = vst [vmem:[#allocation2 + $0x110] sm:$0xff] %v700
    %765 = vst [vmem:[#allocation2 + $0x118] sm:$0xff] %v701
    %766 = vst [vmem:[#allocation2 + $0x120] sm:$0xff] %v702
    %767 = vst [vmem:[#allocation2 + $0x128] sm:$0xff] %v703
    %768 = vst [vmem:[#allocation2 + $0x130] sm:$0xff] %v704
    %769 = vst [vmem:[#allocation2 + $0x138] sm:$0xff] %v705
    %770 = vst [vmem:[#allocation2 + $0x140] sm:$0xff] %v706
    %771 = vst [vmem:[#allocation2 + $0x148] sm:$0xff] %v707
    %772 = vst [vmem:[#allocation2 + $0x150] sm:$0xff] %v708
    %773 = vst [vmem:[#allocation2 + $0x158] sm:$0xff] %v709
    %774 = vst [vmem:[#allocation2 + $0x160] sm:$0xff] %v710
    %775 = vst [vmem:[#allocation2 + $0x168] sm:$0xff] %v711
    %776 = vst [vmem:[#allocation2 + $0x170] sm:$0xff] %v712
    %777 = vst [vmem:[#allocation2 + $0x178] sm:$0xff] %v713
    %778 = vst [vmem:[#allocation2 + $0x180] sm:$0xff] %v714
    %779 = vst [vmem:[#allocation2 + $0x188] sm:$0xff] %v715
    %780 = vst [vmem:[#allocation2 + $0x190] sm:$0xff] %v716
    %781 = vst [vmem:[#allocation2 + $0x198] sm:$0xff] %v717
    %782 = vst [vmem:[#allocation2 + $0x1a0] sm:$0xff] %v718
    %783 = vst [vmem:[#allocation2 + $0x1a8] sm:$0xff] %v719
    %784 = vst [vmem:[#allocation2 + $0x1b0] sm:$0xff] %v720
    %785 = vst [vmem:[#allocation2 + $0x1b8] sm:$0xff] %v721
    %786 = vst [vmem:[#allocation2 + $0x1c0] sm:$0xff] %v722
    %787 = vst [vmem:[#allocation2 + $0x1c8] sm:$0xff] %v723
    %788 = vst [vmem:[#allocation2 + $0x1d0] sm:$0xff] %v724
    %789 = vst [vmem:[#allocation2 + $0x1d8] sm:$0xff] %v725
    %790 = vst [vmem:[#allocation2 + $0x1e0] sm:$0xff] %v726
    %791 = vst [vmem:[#allocation2 + $0x1e8] sm:$0xff] %v727
    %792 = vst [vmem:[#allocation2 + $0x1f0] sm:$0xff] %v728
    %793 = vst [vmem:[#allocation2 + $0x1f8] sm:$0xff] %v729
    // Predicated region
    $region14: #{tpu_custom_call.1} parent=1 // pred_check
      _
    $region15: #{tpu_custom_call.1} parent=1 // pred_check_branch
      %795 = sbr.rel (0) target = $region17
    $region16: #{tpu_custom_call.1} parent=1 // pred_region
      %s797 = ssub.s32 8192, 8192
      %798 = vsyncadd [#allocation3], %s797
      %s799 = sshll.u32 [#allocation2], 4
      %s800 = int_to_ptr.vmem [resolvable:$true] %s799
      %805 = dma.vmem_to_hbm [thread:$0]  %s800, 8192, %s3, [#allocation3], 128, 128, 8
    $region17: #{tpu_custom_call.1} parent=1 // pred_fallthru
      _
    // Predicated region
    $region18: #{tpu_custom_call.1} parent=1 // pred_check
      _
    $region19: #{tpu_custom_call.1} parent=1 // pred_check_branch
      %807 = sbr.rel (0) target = $region21
    $region20: #{tpu_custom_call.1} parent=1 // pred_region
      %808 = dma.done [#allocation3], 8192
    $region21: #{tpu_custom_call.1} parent=1 // pred_fallthru
      _
    %809 = vsyncpa [#allocation3], 1

</llo_original>
